<compile_context>
chip_gen: v7x
topology: tpu7x:2x2x1
jax: 0.10.0
libtpu: 0.0.40
codegen_flags: <defaults>
</compile_context>

<pallas_src>
import math
import functools

import jax
import jax.numpy as jnp
from jax.experimental import pallas as pl
from jax.experimental.pallas import tpu as pltpu


def _resblock_gemm_kernel(p_ref, w_ref, b_ref, r_ref, o_ref):
    # p_ref: (TM, Kp)   bf16 im2col patch tile (pre-activation)
    # w_ref: (Kp, TCo)  bf16 folded (normalized * gamma * g) weight tile
    # b_ref: (1, TCo)   f32 folded bias (gamma*bias + beta)
    # r_ref: (TM, TCo)  f32 residual tile (x in NHWC layout)
    # o_ref: (TM, TCo)  f32 output tile
    p = p_ref[...]
    # LeakyReLU(0.01) fused on the patch tile (equivalent to applying it to x,
    # since im2col only rearranges elements and pad-zeros map to zero).
    p = jnp.where(p >= 0, p, p * jnp.asarray(0.01, p.dtype))
    acc = jnp.dot(p, w_ref[...], preferred_element_type=jnp.float32)
    o_ref[...] = (acc + b_ref[...] + r_ref[...]).astype(o_ref.dtype)


def _im2col(x, ksize, pad):
    """x: (N, C, H, W) -> (N*H*W, C*ksize*ksize), stride 1, 'same' output."""
    N, C, H, W = x.shape
    xp = jnp.pad(x, ((0, 0), (0, 0), (pad, pad), (pad, pad)))
    cols = []
    for kh in range(ksize):
        for kw in range(ksize):
            cols.append(xp[:, :, kh:kh + H, kw:kw + W])        # (N, C, H, W)
    p = jnp.stack(cols, axis=-1)                               # (N, C, H, W, k*k)
    p = jnp.transpose(p, (0, 2, 3, 1, 4))                      # (N, H, W, C, k*k)
    return p.reshape(N * H * W, C * ksize * ksize)


def vunet_resnet_block(x, weight_v, weight_g, bias, gamma, beta, *,
                       kernel_size=3, tile_m=512, vmem_limit_mb=48):
    """Default-config VUnetResnetBlock forward.  x: (N, C, H, W) NCHW."""
    N, Cin, H, W = x.shape
    Cout = weight_v.shape[0]
    assert weight_v.shape == (Cout, Cin, kernel_size, kernel_size)
    assert Cin == Cout, "use_skip=False path requires in_channels == out_channels"
    pad = kernel_size // 2
    M = N * H * W
    K = Cin * kernel_size * kernel_size

    # ---- constant folding (hoisted out of the kernel) ----------------------
    g_flat = gamma.reshape(Cout).astype(jnp.float32)
    beta_flat = beta.reshape(Cout).astype(jnp.float32)
    v32 = weight_v.astype(jnp.float32)
    norm = jnp.sqrt(jnp.sum(v32 * v32, axis=(1, 2, 3)))               # (Cout,)
    scale = g_flat * weight_g.reshape(Cout).astype(jnp.float32) \
        / jnp.maximum(norm, 1e-12)
    w_eff = v32 * scale[:, None, None, None]                          # (Co,Ci,K,K)
    bias_eff = g_flat * bias.astype(jnp.float32) + beta_flat          # (Cout,)

    # ---- GEMM operands: bf16, padded to lane/MXU-friendly sizes ------------
    K_pad = ((K + 127) // 128) * 128
    Cout_pad = ((Cout + 127) // 128) * 128
    tile_cout = 256 if Cout_pad % 256 == 0 else 128

    patches = _im2col(x.astype(jnp.bfloat16), kernel_size, pad)       # (M, K)
    w2d = w_eff.reshape(Cout, K).T.astype(jnp.bfloat16)               # (K, Cout)
    b2d = bias_eff.reshape(1, Cout)                                   # f32
    res = jnp.transpose(x, (0, 2, 3, 1)).reshape(M, Cout)             # f32 NHWC
    res = res.astype(jnp.float32)

    # Tile-M selection: big tiles amortize per-step overhead, but keep >= 2
    # M-tiles so the grid's parallel axis can be sharded across TensorCores.
    tile_m = max(128, (min(tile_m, 2048) // 128) * 128)
    if M >= 256:
        half_m = ((M + 255) // 256) * 128                  # ~M/2, 128-aligned
        tile_m = min(tile_m, max(128, half_m))
    else:
        tile_m = 128
    M_pad = pl.cdiv(M, tile_m) * tile_m

    patches = jnp.pad(patches, ((0, M_pad - M), (0, K_pad - K)))
    w2d = jnp.pad(w2d, ((0, K_pad - K), (0, Cout_pad - Cout)))
    b2d = jnp.pad(b2d, ((0, 0), (0, Cout_pad - Cout)))
    res = jnp.pad(res, ((0, M_pad - M), (0, Cout_pad - Cout)))

    grid = (M_pad // tile_m, Cout_pad // tile_cout)

    out = pl.pallas_call(
        _resblock_gemm_kernel,
        out_shape=jax.ShapeDtypeStruct((M_pad, Cout_pad), jnp.float32),
        grid_spec=pltpu.PrefetchScalarGridSpec(
            num_scalar_prefetch=0,
            grid=grid,
            in_specs=[
                pl.BlockSpec((tile_m, K_pad), lambda i, j: (i, 0)),
                pl.BlockSpec((K_pad, tile_cout), lambda i, j: (0, j)),
                pl.BlockSpec((1, tile_cout), lambda i, j: (0, j)),
                pl.BlockSpec((tile_m, tile_cout), lambda i, j: (i, j)),
            ],
            out_specs=pl.BlockSpec((tile_m, tile_cout), lambda i, j: (i, j)),
        ),
        compiler_params=pltpu.CompilerParams(
            dimension_semantics=("parallel", "parallel"),
            vmem_limit_bytes=vmem_limit_mb * 1024 * 1024),
    )(patches, w2d, b2d, res)

    out = out[:M, :Cout].reshape(N, H, W, Cout)
    return jnp.transpose(out, (0, 3, 1, 2))                  # back to NCHW


if __name__ == "__main__":
    # Default VUnetResnetBlock config: out_channels=4, kernel_size=3,
    # use_skip=False, gated=False, activate=True (LeakyReLU), dropout_p=0.0.
    N, C, H, W = 2, 4, 16, 16
    ksize = 3

    key = jax.random.PRNGKey(0)
    kx, kv, kg, kb = jax.random.split(key, 4)

    x = jax.random.normal(kx, (N, C, H, W), dtype=jnp.float32)

    # Parameters mirroring weight_norm(nn.Conv2d) + gamma/beta of NormConv2d.
    weight_v = 0.05 * jax.random.normal(kv, (C, C, ksize, ksize),
                                        dtype=jnp.float32)
    weight_g = jax.random.uniform(kg, (C,), minval=0.5, maxval=1.5,
                                  dtype=jnp.float32)
    fan_in = C * ksize * ksize
    bound = 1.0 / math.sqrt(fan_in)
    bias = jax.random.uniform(kb, (C,), minval=-bound, maxval=bound,
                              dtype=jnp.float32)
    gamma = jnp.ones((1, C, 1, 1), dtype=jnp.float32)    # module init values
    beta = jnp.zeros((1, C, 1, 1), dtype=jnp.float32)

    run = jax.jit(functools.partial(vunet_resnet_block, kernel_size=ksize))
    out = jax.block_until_ready(run(x, weight_v, weight_g, bias, gamma, beta))

    # Reference: plain-JAX (f32, XLA conv) forward of the same module path.
    norm = jnp.sqrt(jnp.sum(weight_v ** 2, axis=(1, 2, 3), keepdims=True))
    w_n = weight_g.reshape(-1, 1, 1, 1) * weight_v / jnp.maximum(norm, 1e-12)
    h = jnp.where(x >= 0, x, 0.01 * x)
    conv = jax.lax.conv_general_dilated(
        h, w_n, window_strides=(1, 1),
        padding=[(ksize // 2, ksize // 2), (ksize // 2, ksize // 2)],
        dimension_numbers=("NCHW", "OIHW", "NCHW"))
    ref = x + (gamma * (conv + bias.reshape(1, C, 1, 1)) + beta)

    assert out.shape == (N, C, H, W)
    max_err = float(jnp.max(jnp.abs(out - ref)))
    # bf16 GEMM operands -> relaxed tolerance vs the f32 reference.
    assert jnp.allclose(out, ref, atol=5e-2, rtol=5e-2), max_err
    print("KERNEL_OK")
</pallas_src>

<mosaic_0001>
module attributes {stable_mosaic.version = 11 : i64} {
  func.func @_resblock_gemm_kernel(%arg0: i32, %arg1: i32, %arg2: memref<256x128xbf16, #tpu.memory_space<vmem>>, %arg3: memref<128x128xbf16, #tpu.memory_space<vmem>>, %arg4: memref<1x128xf32, #tpu.memory_space<vmem>>, %arg5: memref<256x128xf32, #tpu.memory_space<vmem>>, %arg6: memref<256x128xf32, #tpu.memory_space<vmem>>) attributes {dimension_semantics = [#tpu.dimension_semantics<parallel>, #tpu.dimension_semantics<parallel>], iteration_bounds = array<i64: 2, 1>, scalar_prefetch = 0 : i64, scratch_operands = 0 : i64, tpu.core_type = #tpu.core_type<tc>, window_params = [{transform_indices = @transform_0, window_bounds = array<i64: 256, 128>}, {transform_indices = @transform_1, window_bounds = array<i64: 128, 128>}, {transform_indices = @transform_2, window_bounds = array<i64: 1, 128>}, {transform_indices = @transform_3, window_bounds = array<i64: 256, 128>}, {transform_indices = @transform_4, window_bounds = array<i64: 256, 128>}]} {
    %c0 = arith.constant 0 : index
    %c0_0 = arith.constant 0 : index
    %0 = vector.load %arg2[%c0, %c0_0] : memref<256x128xbf16, #tpu.memory_space<vmem>>, vector<256x128xbf16>
    %cst = arith.constant 0.000000e+00 : bf16
    %1 = vector.broadcast %cst : bf16 to vector<256x128xbf16>
    %2 = arith.cmpf oge, %0, %1 : vector<256x128xbf16>
    %cst_1 = arith.constant 1.000980e-02 : bf16
    %3 = vector.broadcast %cst_1 : bf16 to vector<256x128xbf16>
    %4 = arith.mulf %0, %3 : vector<256x128xbf16>
    %5 = arith.select %2, %0, %4 : vector<256x128xi1>, vector<256x128xbf16>
    %c0_2 = arith.constant 0 : index
    %c0_3 = arith.constant 0 : index
    %6 = vector.load %arg3[%c0_2, %c0_3] : memref<128x128xbf16, #tpu.memory_space<vmem>>, vector<128x128xbf16>
    %cst_4 = arith.constant dense<0.000000e+00> : vector<256x128xf32>
    %7 = tpu.matmul %5, %6, %cst_4 {dimension_numbers = #tpu.dot_dimension_numbers<[1], [0], [0], [1], [0, 0, 1, 1], [], []>} : vector<256x128xbf16>, vector<128x128xbf16>, vector<256x128xf32> -> vector<256x128xf32>
    %c0_5 = arith.constant 0 : index
    %c0_6 = arith.constant 0 : index
    %8 = vector.load %arg4[%c0_5, %c0_6] : memref<1x128xf32, #tpu.memory_space<vmem>>, vector<1x128xf32>
    %9 = vector.broadcast %8 : vector<1x128xf32> to vector<256x128xf32>
    %10 = arith.addf %7, %9 : vector<256x128xf32>
    %c0_7 = arith.constant 0 : index
    %c0_8 = arith.constant 0 : index
    %11 = vector.load %arg5[%c0_7, %c0_8] : memref<256x128xf32, #tpu.memory_space<vmem>>, vector<256x128xf32>
    %12 = arith.addf %10, %11 : vector<256x128xf32>
    %c0_9 = arith.constant 0 : index
    %c0_10 = arith.constant 0 : index
    %13 = vector.load %arg6[%c0_9, %c0_10] : memref<256x128xf32, #tpu.memory_space<vmem>>, vector<256x128xf32>
    tpu.vector_store %arg6[%c0_9, %c0_10], %12 {strides = array<i32>} : memref<256x128xf32, #tpu.memory_space<vmem>>, vector<256x128xf32>,
    return
  }
  func.func @transform_0(%arg0: i32, %arg1: i32) -> (i32, i32) {
    %c0_i32 = arith.constant 0 : i32
    %c0_i32_0 = arith.constant 0 : i32
    return %arg0, %c0_i32 : i32, i32
  }
  func.func @transform_1(%arg0: i32, %arg1: i32) -> (i32, i32) {
    %c0_i32 = arith.constant 0 : i32
    %c0_i32_0 = arith.constant 0 : i32
    return %c0_i32, %arg1 : i32, i32
  }
  func.func @transform_2(%arg0: i32, %arg1: i32) -> (i32, i32) {
    %c0_i32 = arith.constant 0 : i32
    %c0_i32_0 = arith.constant 0 : i32
    return %c0_i32, %arg1 : i32, i32
  }
  func.func @transform_3(%arg0: i32, %arg1: i32) -> (i32, i32) {
    %c0_i32 = arith.constant 0 : i32
    return %arg0, %arg1 : i32, i32
  }
  func.func @transform_4(%arg0: i32, %arg1: i32) -> (i32, i32) {
    %c0_i32 = arith.constant 0 : i32
    return %arg0, %arg1 : i32, i32
  }
}

</mosaic_0001>

<llo_original>
// kernel: vunet_resnet_block.1
$region0: #{vunet_resnet_block.1}
  #allocation0 [shape = 'u32[]', space=smem, size = 0x4, offset = 0x4, fixed_abs, tag = 'smem constant byte address 0x4 - core index']
  #allocation1 [shape = 'u32[144,128]{1,0:T(1,128)}', space=vmem, size = 0x12000, scoped, tag = 'internal scratch']
  %s0 = inlined_call_operand.vmem [shape: bf16[512,128], index: 0, kind: input, shape index: {}]
  %s1 = inlined_call_operand.vmem [shape: bf16[128,128], index: 1, kind: input, shape index: {}]
  %s2 = inlined_call_operand.vmem [shape: f32[1,128], index: 2, kind: input, shape index: {}]
  %s3 = inlined_call_operand.vmem [shape: f32[512,128], index: 3, kind: input, shape index: {}]
  %s4 = inlined_call_operand.vmem [shape: f32[512,128], index: 4, kind: output, shape index: {}]
  %s5 = sld [smem:[#allocation0]]
  $region49: #{vunet_resnet_block.1} parent=0
    _
  %s7 = ssub.s32 1, %s5
  %s8 = scalar_select 0, %s7, %s5
  loop: start=0, step=1, limit=4
  $region2: #{vunet_resnet_block.1} parent=0 // loop_pre_header
    _
  $region3: #{vunet_resnet_block.1} parent=0 // loop_header
    %s10 = sphi 0, %s14
    %p11 = scmp.ge.s32.totalorder %s10, 4
    %s17 = sphi 0, %s29
    %s18 = sphi 0, %s25
    %s19 = sphi 0, %s17
    %s20 = sphi 0, %s18
    %s21 = sphi 0, %s19
    %s22 = sphi 0, %s20
    %s32 = sphi 0, %s34
    %s35 = sphi 0, %s32
    %s36 = sphi 0, %s35
    %s52 = sphi 0, %s36
    %s58 = sphi 0, %s60
    %s61 = sphi 0, %s58
    %s62 = sphi 0, %s61
    %s78 = sphi 0, %s62
    %s84 = sphi 0, %s86
    %s87 = sphi 0, %s84
    %s88 = sphi 0, %s87
    %s104 = sphi 0, %s88
    %s112 = sphi 0, %s114
    %s115 = sphi 0, %s112
    %s116 = sphi 0, %s115
    %s132 = sphi 0, %s116
    %s140 = sphi 0, %s142
    %s143 = sphi 0, %s140
    %s144 = sphi 0, %s143
    %s160 = sphi 0, %s144
  $region4: #{vunet_resnet_block.1} parent=0 // loop_header_branch
    %13 = sbr.rel (%p11) target = $region8
  $region5: #{vunet_resnet_block.1} parent=0 // loop_body
    %s15 = ssub.s32 %s10, 1
    %s16 = ssub.s32 %s10, 2
    %s23 = sadd.s32 1, %s18
    %p24 = scmp.ge.s32.totalorder %s23, 1
    %s25 = scalar_select %p24, 0, %s23
    %s26 = sadd.s32 1, %s17
    %s27 = scalar_select %p24, %s26, %s17
    %p28 = scmp.ge.s32.totalorder %s27, 2
    %s29 = scalar_select %p28, 0, %s27
    %s30 = ssub.s32 %s17, %s29
    %p31 = scmp.eq.s32.totalorder %s30, 0
    %s33 = sadd.s32 %s32, 1
    %s34 = scalar_select %p31, %s32, %s33
    %p37 = pneg %p31
    %p38 = scmp.eq.s32.totalorder %s10, 1
    %p39 = por %p37, %p38
    %p40 = scmp.ne.s32.totalorder %s32, %s35
    %p41 = scmp.eq.s32.totalorder %s10, 0
    %p42 = por %p40, %p41
    %p43 = scmp.ne.s32.totalorder %s32, %s35
    %p44 = scmp.eq.s32.totalorder %s15, 1
    %p45 = por %p43, %p44
    %p46 = scmp.ne.s32.totalorder %s35, %s36
    %p47 = scmp.eq.s32.totalorder %s15, 0
    %p48 = por %p46, %p47
    %p49 = scmp.ne.s32.totalorder %s35, %s36
    %p50 = scmp.eq.s32.totalorder %s16, 1
    %p51 = por %p49, %p50
    %p53 = scmp.ne.s32.totalorder %s36, %s52
    %p54 = scmp.eq.s32.totalorder %s16, 0
    %p55 = por %p53, %p54
    %s56 = ssub.s32 %s18, %s25
    %p57 = scmp.eq.s32.totalorder %s56, 0
    %s59 = sadd.s32 %s58, 1
    %s60 = scalar_select %p57, %s58, %s59
    %p63 = pneg %p57
    %p64 = scmp.eq.s32.totalorder %s10, 1
    %p65 = por %p63, %p64
    %p66 = scmp.ne.s32.totalorder %s58, %s61
    %p67 = scmp.eq.s32.totalorder %s10, 0
    %p68 = por %p66, %p67
    %p69 = scmp.ne.s32.totalorder %s58, %s61
    %p70 = scmp.eq.s32.totalorder %s15, 1
    %p71 = por %p69, %p70
    %p72 = scmp.ne.s32.totalorder %s61, %s62
    %p73 = scmp.eq.s32.totalorder %s15, 0
    %p74 = por %p72, %p73
    %p75 = scmp.ne.s32.totalorder %s61, %s62
    %p76 = scmp.eq.s32.totalorder %s16, 1
    %p77 = por %p75, %p76
    %p79 = scmp.ne.s32.totalorder %s62, %s78
    %p80 = scmp.eq.s32.totalorder %s16, 0
    %p81 = por %p79, %p80
    %s82 = ssub.s32 %s18, %s25
    %p83 = scmp.eq.s32.totalorder %s82, 0
    %s85 = sadd.s32 %s84, 1
    %s86 = scalar_select %p83, %s84, %s85
    %p89 = pneg %p83
    %p90 = scmp.eq.s32.totalorder %s10, 1
    %p91 = por %p89, %p90
    %p92 = scmp.ne.s32.totalorder %s84, %s87
    %p93 = scmp.eq.s32.totalorder %s10, 0
    %p94 = por %p92, %p93
    %p95 = scmp.ne.s32.totalorder %s84, %s87
    %p96 = scmp.eq.s32.totalorder %s15, 1
    %p97 = por %p95, %p96
    %p98 = scmp.ne.s32.totalorder %s87, %s88
    %p99 = scmp.eq.s32.totalorder %s15, 0
    %p100 = por %p98, %p99
    %p101 = scmp.ne.s32.totalorder %s87, %s88
    %p102 = scmp.eq.s32.totalorder %s16, 1
    %p103 = por %p101, %p102
    %p105 = scmp.ne.s32.totalorder %s88, %s104
    %p106 = scmp.eq.s32.totalorder %s16, 0
    %p107 = por %p105, %p106
    %s108 = ssub.s32 %s17, %s29
    %s109 = ssub.s32 %s18, %s25
    %s110 = sor.u32 %s108, %s109
    %p111 = scmp.eq.s32.totalorder %s110, 0
    %s113 = sadd.s32 %s112, 1
    %s114 = scalar_select %p111, %s112, %s113
    %p117 = pneg %p111
    %p118 = scmp.eq.s32.totalorder %s10, 1
    %p119 = por %p117, %p118
    %p120 = scmp.ne.s32.totalorder %s112, %s115
    %p121 = scmp.eq.s32.totalorder %s10, 0
    %p122 = por %p120, %p121
    %p123 = scmp.ne.s32.totalorder %s112, %s115
    %p124 = scmp.eq.s32.totalorder %s15, 1
    %p125 = por %p123, %p124
    %p126 = scmp.ne.s32.totalorder %s115, %s116
    %p127 = scmp.eq.s32.totalorder %s15, 0
    %p128 = por %p126, %p127
    %p129 = scmp.ne.s32.totalorder %s115, %s116
    %p130 = scmp.eq.s32.totalorder %s16, 1
    %p131 = por %p129, %p130
    %p133 = scmp.ne.s32.totalorder %s116, %s132
    %p134 = scmp.eq.s32.totalorder %s16, 0
    %p135 = por %p133, %p134
    %s136 = ssub.s32 %s17, %s29
    %s137 = ssub.s32 %s18, %s25
    %s138 = sor.u32 %s136, %s137
    %p139 = scmp.eq.s32.totalorder %s138, 0
    %s141 = sadd.s32 %s140, 1
    %s142 = scalar_select %p139, %s140, %s141
    %p145 = pneg %p139
    %p146 = scmp.eq.s32.totalorder %s10, 1
    %p147 = por %p145, %p146
    %p148 = scmp.ne.s32.totalorder %s140, %s143
    %p149 = scmp.eq.s32.totalorder %s10, 0
    %p150 = por %p148, %p149
    %p151 = scmp.ne.s32.totalorder %s140, %s143
    %p152 = scmp.eq.s32.totalorder %s15, 1
    %p153 = por %p151, %p152
    %p154 = scmp.ne.s32.totalorder %s143, %s144
    %p155 = scmp.eq.s32.totalorder %s15, 0
    %p156 = por %p154, %p155
    %p157 = scmp.ne.s32.totalorder %s143, %s144
    %p158 = scmp.eq.s32.totalorder %s16, 1
    %p159 = por %p157, %p158
    %p161 = scmp.ne.s32.totalorder %s144, %s160
    %p162 = scmp.eq.s32.totalorder %s16, 0
    %p163 = por %p161, %p162
    %p164 = scmp.le.s32.totalorder 1, %s10
    %p165 = scmp.lt.s32.totalorder %s10, 3
    %p166 = pnand %p164, %p165
    %p167 = pneg %p166
    // Predicated region
    $region9: #{vunet_resnet_block.1} parent=5 // pred_check
      _
    $region10: #{vunet_resnet_block.1} parent=5 // pred_check_branch
      %169 = sbr.rel (%p166) target = $region12
    $region11: #{vunet_resnet_block.1} parent=5 // pred_region
      %s170 = ssub.s32 %s10, 1
      // Predicated region
      $region13: #{vunet_resnet_block.1} parent=11 // pred_check
        %p171 = pneg %p74
      $region14: #{vunet_resnet_block.1} parent=11 // pred_check_branch
        %173 = sbr.rel (%p171) target = $region16
      $region15: #{vunet_resnet_block.1} parent=11 // pred_region
        %p174 = scmp.lt.s32.totalorder %s20, 0
        %s175 = scalar_select %p174, %s20, 0
        %s176 = smul.addr %s175, 4
        %s177 = scalar_lea.vmem %s1, %s176
      $region16: #{vunet_resnet_block.1} parent=11 // pred_fallthru
        _
      // Predicated region
      $region17: #{vunet_resnet_block.1} parent=11 // pred_check
        %p178 = pneg %p100
      $region18: #{vunet_resnet_block.1} parent=11 // pred_check_branch
        %180 = sbr.rel (%p178) target = $region20
      $region19: #{vunet_resnet_block.1} parent=11 // pred_region
        %p181 = scmp.lt.s32.totalorder %s20, 0
        %s182 = scalar_select %p181, %s20, 0
        %s183 = scalar_lea.vmem %s2, %s182
      $region20: #{vunet_resnet_block.1} parent=11 // pred_fallthru
        _
    $region12: #{vunet_resnet_block.1} parent=5 // pred_fallthru
      _
    %p184 = scmp.lt.s32.totalorder %s10, 2
    // Predicated region
    $region21: #{vunet_resnet_block.1} parent=5 // pred_check
      %p185 = pneg %p184
    $region22: #{vunet_resnet_block.1} parent=5 // pred_check_branch
      %187 = sbr.rel (%p185) target = $region24
    $region23: #{vunet_resnet_block.1} parent=5 // pred_region
      // Predicated region
      $region25: #{vunet_resnet_block.1} parent=23 // pred_check
        %p188 = pneg %p42
      $region26: #{vunet_resnet_block.1} parent=23 // pred_check_branch
        %190 = sbr.rel (%p188) target = $region28
      $region27: #{vunet_resnet_block.1} parent=23 // pred_region
        %s191 = smul.u32 32, %s17
        %p192 = scmp.lt.s32.totalorder %s191, 63
        %s193 = scalar_select %p192, %s191, 63
        %s194 = smul.addr %s193, 4
        %s195 = scalar_lea.vmem %s0, %s194
        %s196 = smul.u32 32, %s17
      $region28: #{vunet_resnet_block.1} parent=23 // pred_fallthru
        _
      // Predicated region
      $region29: #{vunet_resnet_block.1} parent=23 // pred_check
        %p197 = pneg %p122
      $region30: #{vunet_resnet_block.1} parent=23 // pred_check_branch
        %199 = sbr.rel (%p197) target = $region32
      $region31: #{vunet_resnet_block.1} parent=23 // pred_region
        %s200 = smul.u32 32, %s17
        %p201 = scmp.lt.s32.totalorder %s200, 63
        %s202 = scalar_select %p201, %s200, 63
        %p203 = scmp.lt.s32.totalorder %s18, 0
        %s204 = scalar_select %p203, %s18, 0
        %s205 = sadd.s32 %s204, %s202
        %s206 = smul.addr %s205, 8
        %s207 = scalar_lea.vmem %s3, %s206
        %s208 = smul.u32 32, %s17
      $region32: #{vunet_resnet_block.1} parent=23 // pred_fallthru
        _
    $region24: #{vunet_resnet_block.1} parent=5 // pred_fallthru
      _
    %p209 = scmp.le.s32.totalorder 1, %s10
    %p210 = scmp.lt.s32.totalorder %s10, 3
    %p211 = pnand %p209, %p210
    %p212 = pneg %p211
    // Predicated region
    $region33: #{vunet_resnet_block.1} parent=5 // pred_check
      _
    $region34: #{vunet_resnet_block.1} parent=5 // pred_check_branch
      %214 = sbr.rel (%p211) target = $region36
    $region35: #{vunet_resnet_block.1} parent=5 // pred_region
      %s215 = ssub.s32 %s10, 1
      %s216 = smul.u32 32, %s19
      %p217 = scmp.lt.s32.totalorder %s216, 63
      %s218 = scalar_select %p217, %s216, 63
      %s219 = smul.addr %s218, 4
      %s220 = scalar_lea.vmem %s0, %s219
      %p221 = pneg %p48
      %p222 = pneg %p45
      %p223 = scmp.lt.s32.totalorder %s20, 0
      %s224 = scalar_select %p223, %s20, 0
      %s225 = smul.addr %s224, 4
      %s226 = scalar_lea.vmem %s1, %s225
      %p227 = pneg %p74
      %p228 = pneg %p71
      %p229 = scmp.lt.s32.totalorder %s20, 0
      %s230 = scalar_select %p229, %s20, 0
      %s231 = scalar_lea.vmem %s2, %s230
      %p232 = pneg %p100
      %p233 = pneg %p97
      %s234 = smul.u32 32, %s19
      %p235 = scmp.lt.s32.totalorder %s234, 63
      %s236 = scalar_select %p235, %s234, 63
      %p237 = scmp.lt.s32.totalorder %s20, 0
      %s238 = scalar_select %p237, %s20, 0
      %s239 = sadd.s32 %s238, %s236
      %s240 = smul.addr %s239, 8
      %s241 = scalar_lea.vmem %s3, %s240
      %p242 = pneg %p128
      %p243 = pneg %p125
      %p244 = pneg %p156
      %p245 = pneg %p153
      %s246 = smul.u32 32, %s19
      %p247 = scmp.lt.s32.totalorder %s246, 63
      %s248 = scalar_select %p247, %s246, 63
      %p249 = scmp.lt.s32.totalorder %s20, 0
      %s250 = scalar_select %p249, %s20, 0
      %s251 = sadd.s32 %s250, %s248
      %s252 = smul.addr %s251, 8
      %s253 = scalar_lea.vmem %s4, %s252
      %s254 = smul.u32 32, %s19
      %p255 = scmp.lt.s32.totalorder %s254, 63
      %s256 = scalar_select %p255, %s254, 63
      %s257 = smul.addr %s256, 4
      %s258 = scalar_lea.vmem %s0, %s257
      %s259 = smul.u32 32, %s19
      %p260 = scmp.lt.s32.totalorder %s20, 0
      %s261 = scalar_select %p260, %s20, 0
      %s262 = smul.addr %s261, 4
      %s263 = scalar_lea.vmem %s1, %s262
      %p264 = scmp.lt.s32.totalorder %s20, 0
      %s265 = scalar_select %p264, %s20, 0
      %s266 = scalar_lea.vmem %s2, %s265
      %s267 = smul.u32 32, %s19
      %p268 = scmp.lt.s32.totalorder %s267, 63
      %s269 = scalar_select %p268, %s267, 63
      %p270 = scmp.lt.s32.totalorder %s20, 0
      %s271 = scalar_select %p270, %s20, 0
      %s272 = sadd.s32 %s271, %s269
      %s273 = smul.addr %s272, 8
      %s274 = scalar_lea.vmem %s3, %s273
      %s275 = smul.u32 32, %s19
      %s276 = smul.u32 32, %s19
      %p277 = scmp.lt.s32.totalorder %s276, 63
      %s278 = scalar_select %p277, %s276, 63
      %p279 = scmp.lt.s32.totalorder %s20, 0
      %s280 = scalar_select %p279, %s20, 0
      %s281 = sadd.s32 %s280, %s278
      %s282 = smul.addr %s281, 8
      %s283 = scalar_lea.vmem %s4, %s282
      %s284 = smul.u32 32, %s19
      %v287 = vld [vmem:[%s258] sm:$0xf]
      %v288 = vld [vmem:[%s258 + $0x4] sm:$0xf]
      %v289 = vld [vmem:[%s258 + $0x8] sm:$0xf]
      %v290 = vld [vmem:[%s258 + $0xc] sm:$0xf]
      %v291 = vld [vmem:[%s258 + $0x10] sm:$0xf]
      %v292 = vld [vmem:[%s258 + $0x14] sm:$0xf]
      %v293 = vld [vmem:[%s258 + $0x18] sm:$0xf]
      %v294 = vld [vmem:[%s258 + $0x1c] sm:$0xf]
      %v295 = vld [vmem:[%s258 + $0x20] sm:$0xf]
      %v296 = vld [vmem:[%s258 + $0x24] sm:$0xf]
      %v297 = vld [vmem:[%s258 + $0x28] sm:$0xf]
      %v298 = vld [vmem:[%s258 + $0x2c] sm:$0xf]
      %v299 = vld [vmem:[%s258 + $0x30] sm:$0xf]
      %v300 = vld [vmem:[%s258 + $0x34] sm:$0xf]
      %v301 = vld [vmem:[%s258 + $0x38] sm:$0xf]
      %v302 = vld [vmem:[%s258 + $0x3c] sm:$0xf]
      %v303 = vld [vmem:[%s258 + $0x40] sm:$0xf]
      %v304 = vld [vmem:[%s258 + $0x44] sm:$0xf]
      %v305 = vld [vmem:[%s258 + $0x48] sm:$0xf]
      %v306 = vld [vmem:[%s258 + $0x4c] sm:$0xf]
      %v307 = vld [vmem:[%s258 + $0x50] sm:$0xf]
      %v308 = vld [vmem:[%s258 + $0x54] sm:$0xf]
      %v309 = vld [vmem:[%s258 + $0x58] sm:$0xf]
      %v310 = vld [vmem:[%s258 + $0x5c] sm:$0xf]
      %v311 = vld [vmem:[%s258 + $0x60] sm:$0xf]
      %v312 = vld [vmem:[%s258 + $0x64] sm:$0xf]
      %v313 = vld [vmem:[%s258 + $0x68] sm:$0xf]
      %v314 = vld [vmem:[%s258 + $0x6c] sm:$0xf]
      %v315 = vld [vmem:[%s258 + $0x70] sm:$0xf]
      %v316 = vld [vmem:[%s258 + $0x74] sm:$0xf]
      %v317 = vld [vmem:[%s258 + $0x78] sm:$0xf]
      %v318 = vld [vmem:[%s258 + $0x7c] sm:$0xf]
      %vm319 = vcmp.ge.bf16.partialorder %v287, 0
      %vm320 = vcmp.ge.bf16.partialorder %v288, 0
      %vm321 = vcmp.ge.bf16.partialorder %v289, 0
      %vm322 = vcmp.ge.bf16.partialorder %v290, 0
      %vm323 = vcmp.ge.bf16.partialorder %v291, 0
      %vm324 = vcmp.ge.bf16.partialorder %v292, 0
      %vm325 = vcmp.ge.bf16.partialorder %v293, 0
      %vm326 = vcmp.ge.bf16.partialorder %v294, 0
      %vm327 = vcmp.ge.bf16.partialorder %v295, 0
      %vm328 = vcmp.ge.bf16.partialorder %v296, 0
      %vm329 = vcmp.ge.bf16.partialorder %v297, 0
      %vm330 = vcmp.ge.bf16.partialorder %v298, 0
      %vm331 = vcmp.ge.bf16.partialorder %v299, 0
      %vm332 = vcmp.ge.bf16.partialorder %v300, 0
      %vm333 = vcmp.ge.bf16.partialorder %v301, 0
      %vm334 = vcmp.ge.bf16.partialorder %v302, 0
      %vm335 = vcmp.ge.bf16.partialorder %v303, 0
      %vm336 = vcmp.ge.bf16.partialorder %v304, 0
      %vm337 = vcmp.ge.bf16.partialorder %v305, 0
      %vm338 = vcmp.ge.bf16.partialorder %v306, 0
      %vm339 = vcmp.ge.bf16.partialorder %v307, 0
      %vm340 = vcmp.ge.bf16.partialorder %v308, 0
      %vm341 = vcmp.ge.bf16.partialorder %v309, 0
      %vm342 = vcmp.ge.bf16.partialorder %v310, 0
      %vm343 = vcmp.ge.bf16.partialorder %v311, 0
      %vm344 = vcmp.ge.bf16.partialorder %v312, 0
      %vm345 = vcmp.ge.bf16.partialorder %v313, 0
      %vm346 = vcmp.ge.bf16.partialorder %v314, 0
      %vm347 = vcmp.ge.bf16.partialorder %v315, 0
      %vm348 = vcmp.ge.bf16.partialorder %v316, 0
      %vm349 = vcmp.ge.bf16.partialorder %v317, 0
      %vm350 = vcmp.ge.bf16.partialorder %v318, 0
      %v351 = vmul.bf16 %v287, 1009007652
      %v352 = vmul.bf16 %v288, 1009007652
      %v353 = vmul.bf16 %v289, 1009007652
      %v354 = vmul.bf16 %v290, 1009007652
      %v355 = vmul.bf16 %v291, 1009007652
      %v356 = vmul.bf16 %v292, 1009007652
      %v357 = vmul.bf16 %v293, 1009007652
      %v358 = vmul.bf16 %v294, 1009007652
      %v359 = vmul.bf16 %v295, 1009007652
      %v360 = vmul.bf16 %v296, 1009007652
      %v361 = vmul.bf16 %v297, 1009007652
      %v362 = vmul.bf16 %v298, 1009007652
      %v363 = vmul.bf16 %v299, 1009007652
      %v364 = vmul.bf16 %v300, 1009007652
      %v365 = vmul.bf16 %v301, 1009007652
      %v366 = vmul.bf16 %v302, 1009007652
      %v367 = vmul.bf16 %v303, 1009007652
      %v368 = vmul.bf16 %v304, 1009007652
      %v369 = vmul.bf16 %v305, 1009007652
      %v370 = vmul.bf16 %v306, 1009007652
      %v371 = vmul.bf16 %v307, 1009007652
      %v372 = vmul.bf16 %v308, 1009007652
      %v373 = vmul.bf16 %v309, 1009007652
      %v374 = vmul.bf16 %v310, 1009007652
      %v375 = vmul.bf16 %v311, 1009007652
      %v376 = vmul.bf16 %v312, 1009007652
      %v377 = vmul.bf16 %v313, 1009007652
      %v378 = vmul.bf16 %v314, 1009007652
      %v379 = vmul.bf16 %v315, 1009007652
      %v380 = vmul.bf16 %v316, 1009007652
      %v381 = vmul.bf16 %v317, 1009007652
      %v382 = vmul.bf16 %v318, 1009007652
      %v383 = vsel %vm319, %v287, %v351
      %v384 = vsel %vm320, %v288, %v352
      %v385 = vsel %vm321, %v289, %v353
      %v386 = vsel %vm322, %v290, %v354
      %v387 = vsel %vm323, %v291, %v355
      %v388 = vsel %vm324, %v292, %v356
      %v389 = vsel %vm325, %v293, %v357
      %v390 = vsel %vm326, %v294, %v358
      %v391 = vsel %vm327, %v295, %v359
      %v392 = vsel %vm328, %v296, %v360
      %v393 = vsel %vm329, %v297, %v361
      %v394 = vsel %vm330, %v298, %v362
      %v395 = vsel %vm331, %v299, %v363
      %v396 = vsel %vm332, %v300, %v364
      %v397 = vsel %vm333, %v301, %v365
      %v398 = vsel %vm334, %v302, %v366
      %v399 = vsel %vm335, %v303, %v367
      %v400 = vsel %vm336, %v304, %v368
      %v401 = vsel %vm337, %v305, %v369
      %v402 = vsel %vm338, %v306, %v370
      %v403 = vsel %vm339, %v307, %v371
      %v404 = vsel %vm340, %v308, %v372
      %v405 = vsel %vm341, %v309, %v373
      %v406 = vsel %vm342, %v310, %v374
      %v407 = vsel %vm343, %v311, %v375
      %v408 = vsel %vm344, %v312, %v376
      %v409 = vsel %vm345, %v313, %v377
      %v410 = vsel %vm346, %v314, %v378
      %v411 = vsel %vm347, %v315, %v379
      %v412 = vsel %vm348, %v316, %v380
      %v413 = vsel %vm349, %v317, %v381
      %v414 = vsel %vm350, %v318, %v382
      %v415 = vld [vmem:[%s263] sm:$0xf]
      %v416 = vld [vmem:[%s263 + $0x4] sm:$0xf]
      %v417 = vld [vmem:[%s263 + $0x8] sm:$0xf]
      %v418 = vld [vmem:[%s263 + $0xc] sm:$0xf]
      %v419 = vld [vmem:[%s263 + $0x10] sm:$0xf]
      %v420 = vld [vmem:[%s263 + $0x14] sm:$0xf]
      %v421 = vld [vmem:[%s263 + $0x18] sm:$0xf]
      %v422 = vld [vmem:[%s263 + $0x1c] sm:$0xf]
      %v423 = vld [vmem:[%s263 + $0x20] sm:$0xf]
      %v424 = vld [vmem:[%s263 + $0x24] sm:$0xf]
      %v425 = vld [vmem:[%s263 + $0x28] sm:$0xf]
      %v426 = vld [vmem:[%s263 + $0x2c] sm:$0xf]
      %v427 = vld [vmem:[%s263 + $0x30] sm:$0xf]
      %v428 = vld [vmem:[%s263 + $0x34] sm:$0xf]
      %v429 = vld [vmem:[%s263 + $0x38] sm:$0xf]
      %v430 = vld [vmem:[%s263 + $0x3c] sm:$0xf]
      %v431 = vld [vmem:[%s266] sm:$0x1]
      %v433 = vlaneseq
      %v434 = vshrl.u32 %v433, 7
      %v435 = vsub.s32 0, %v434
      %v436 = vrot.slane %v431, %v435
      %v470 = vunpack.c.l.b16 %v383
      %v471 = vunpack.c.l.b16 %v384
      %v472 = vunpack.c.l.b16 %v385
      %v473 = vunpack.c.l.b16 %v386
      %v474 = vunpack.c.l.b16 %v387
      %v475 = vunpack.c.l.b16 %v388
      %v476 = vunpack.c.l.b16 %v389
      %v477 = vunpack.c.l.b16 %v390
      %v478 = vunpack.c.l.b16 %v391
      %v479 = vunpack.c.l.b16 %v392
      %v480 = vunpack.c.l.b16 %v393
      %v481 = vunpack.c.l.b16 %v394
      %v482 = vunpack.c.l.b16 %v395
      %v483 = vunpack.c.l.b16 %v396
      %v484 = vunpack.c.l.b16 %v397
      %v485 = vunpack.c.l.b16 %v398
      %v486 = vunpack.c.l.b16 %v399
      %v487 = vunpack.c.l.b16 %v400
      %v488 = vunpack.c.l.b16 %v401
      %v489 = vunpack.c.l.b16 %v402
      %v490 = vunpack.c.l.b16 %v403
      %v491 = vunpack.c.l.b16 %v404
      %v492 = vunpack.c.l.b16 %v405
      %v493 = vunpack.c.l.b16 %v406
      %v494 = vunpack.c.l.b16 %v407
      %v495 = vunpack.c.l.b16 %v408
      %v496 = vunpack.c.l.b16 %v409
      %v497 = vunpack.c.l.b16 %v410
      %v498 = vunpack.c.l.b16 %v411
      %v499 = vunpack.c.l.b16 %v412
      %v500 = vunpack.c.l.b16 %v413
      %v501 = vunpack.c.l.b16 %v414
      %v502 = vpack.c.b16 %v471, %v470
      %v503 = vpack.c.b16 %v473, %v472
      %v504 = vpack.c.b16 %v475, %v474
      %v505 = vpack.c.b16 %v477, %v476
      %v506 = vpack.c.b16 %v479, %v478
      %v507 = vpack.c.b16 %v481, %v480
      %v508 = vpack.c.b16 %v483, %v482
      %v509 = vpack.c.b16 %v485, %v484
      %v510 = vpack.c.b16 %v487, %v486
      %v511 = vpack.c.b16 %v489, %v488
      %v512 = vpack.c.b16 %v491, %v490
      %v513 = vpack.c.b16 %v493, %v492
      %v514 = vpack.c.b16 %v495, %v494
      %v515 = vpack.c.b16 %v497, %v496
      %v516 = vpack.c.b16 %v499, %v498
      %v517 = vpack.c.b16 %v501, %v500
      %v550 = vunpack.c.l.b16 %v415
      %v551 = vunpack.c.l.b16 %v416
      %v552 = vunpack.c.l.b16 %v417
      %v553 = vunpack.c.l.b16 %v418
      %v554 = vunpack.c.l.b16 %v419
      %v555 = vunpack.c.l.b16 %v420
      %v556 = vunpack.c.l.b16 %v421
      %v557 = vunpack.c.l.b16 %v422
      %v558 = vunpack.c.l.b16 %v423
      %v559 = vunpack.c.l.b16 %v424
      %v560 = vunpack.c.l.b16 %v425
      %v561 = vunpack.c.l.b16 %v426
      %v562 = vunpack.c.l.b16 %v427
      %v563 = vunpack.c.l.b16 %v428
      %v564 = vunpack.c.l.b16 %v429
      %v565 = vunpack.c.l.b16 %v430
      %v566 = vpack.c.b16 %v551, %v550
      %v567 = vpack.c.b16 %v553, %v552
      %v568 = vpack.c.b16 %v555, %v554
      %v569 = vpack.c.b16 %v557, %v556
      %v570 = vpack.c.b16 %v559, %v558
      %v571 = vpack.c.b16 %v561, %v560
      %v572 = vpack.c.b16 %v563, %v562
      %v573 = vpack.c.b16 %v565, %v564
      %582 = vmatprep.subr.bf16.mxu0 0
      %583 = vmatpush1.bf16.msra.mxu0 %v566
      %584 = vmatprep.subr.bf16.mxu0 0
      %585 = vmatpush1.bf16.msra.mxu0 %v567
      %586 = vmatprep.subr.bf16.mxu0 0
      %587 = vmatpush1.bf16.msra.mxu0 %v568
      %588 = vmatprep.subr.bf16.mxu0 0
      %589 = vmatpush1.bf16.msra.mxu0 %v569
      %590 = vmatprep.subr.bf16.mxu0 0
      %591 = vmatpush1.bf16.msra.mxu0 %v570
      %592 = vmatprep.subr.bf16.mxu0 0
      %593 = vmatpush1.bf16.msra.mxu0 %v571
      %594 = vmatprep.subr.bf16.mxu0 0
      %595 = vmatpush1.bf16.msra.mxu0 %v572
      %596 = vmatprep.subr.bf16.mxu0 0
      %597 = vmatpush1.bf16.msra.mxu0 %v573
      %598 = vmatprep.subr.bf16.mxu0 0
      %599 = vmatpush1.bf16.msra.mxu0 0
      %600 = vmatprep.subr.bf16.mxu0 0
      %601 = vmatpush1.bf16.msra.mxu0 0
      %602 = vmatprep.subr.bf16.mxu0 0
      %603 = vmatpush1.bf16.msra.mxu0 0
      %604 = vmatprep.subr.bf16.mxu0 0
      %605 = vmatpush1.bf16.msra.mxu0 0
      %606 = vmatprep.subr.bf16.mxu0 0
      %607 = vmatpush1.bf16.msra.mxu0 0
      %608 = vmatprep.subr.bf16.mxu0 0
      %609 = vmatpush1.bf16.msra.mxu0 0
      %610 = vmatprep.subr.bf16.mxu0 0
      %611 = vmatpush1.bf16.msra.mxu0 0
      %612 = vmatprep.subr.bf16.mxu0 0
      %613 = vmatpush1.bf16.msra.mxu0 0
      %614 = vmatprep.mubr.bf16.mxu0 0
      %615 = vmatmul.mubr.bf16.gmra.mrb[0].mxu0 %v502
      %v616 = vpop.f32.mrb[0].mxu0
      %v617 = vadd.f32 %v436, %v616
      %v618 = vpop.f32.mrb[0].mxu0
      %v619 = vpop.f32.mrb[0].mxu0
      %v620 = vadd.f32 %v436, %v619
      %v621 = vpop.f32.mrb[0].mxu0
      %622 = vmatprep.mubr.bf16.mxu0 0
      %623 = vmatmul.mubr.bf16.gmra.mrb[0].mxu0 %v503
      %v624 = vpop.f32.mrb[0].mxu0
      %v625 = vadd.f32 %v436, %v624
      %v626 = vpop.f32.mrb[0].mxu0
      %v627 = vpop.f32.mrb[0].mxu0
      %v628 = vadd.f32 %v436, %v627
      %v629 = vpop.f32.mrb[0].mxu0
      %630 = vmatprep.mubr.bf16.mxu0 0
      %631 = vmatmul.mubr.bf16.gmra.mrb[0].mxu0 %v504
      %v632 = vpop.f32.mrb[0].mxu0
      %v633 = vadd.f32 %v436, %v632
      %v634 = vpop.f32.mrb[0].mxu0
      %v635 = vpop.f32.mrb[0].mxu0
      %v636 = vadd.f32 %v436, %v635
      %v637 = vpop.f32.mrb[0].mxu0
      %638 = vmatprep.mubr.bf16.mxu0 0
      %639 = vmatmul.mubr.bf16.gmra.mrb[0].mxu0 %v505
      %v640 = vpop.f32.mrb[0].mxu0
      %v641 = vadd.f32 %v436, %v640
      %v642 = vpop.f32.mrb[0].mxu0
      %v643 = vpop.f32.mrb[0].mxu0
      %v644 = vadd.f32 %v436, %v643
      %v645 = vpop.f32.mrb[0].mxu0
      %646 = vmatprep.mubr.bf16.mxu0 0
      %647 = vmatmul.mubr.bf16.gmra.mrb[0].mxu0 %v506
      %v648 = vpop.f32.mrb[0].mxu0
      %v649 = vadd.f32 %v436, %v648
      %v650 = vpop.f32.mrb[0].mxu0
      %v651 = vpop.f32.mrb[0].mxu0
      %v652 = vadd.f32 %v436, %v651
      %v653 = vpop.f32.mrb[0].mxu0
      %654 = vmatprep.mubr.bf16.mxu0 0
      %655 = vmatmul.mubr.bf16.gmra.mrb[0].mxu0 %v507
      %v656 = vpop.f32.mrb[0].mxu0
      %v657 = vadd.f32 %v436, %v656
      %v658 = vpop.f32.mrb[0].mxu0
      %v659 = vpop.f32.mrb[0].mxu0
      %v660 = vadd.f32 %v436, %v659
      %v661 = vpop.f32.mrb[0].mxu0
      %662 = vmatprep.mubr.bf16.mxu0 0
      %663 = vmatmul.mubr.bf16.gmra.mrb[0].mxu0 %v508
      %v664 = vpop.f32.mrb[0].mxu0
      %v665 = vadd.f32 %v436, %v664
      %v666 = vpop.f32.mrb[0].mxu0
      %v667 = vpop.f32.mrb[0].mxu0
      %v668 = vadd.f32 %v436, %v667
      %v669 = vpop.f32.mrb[0].mxu0
      %670 = vmatprep.mubr.bf16.mxu0 0
      %671 = vmatmul.mubr.bf16.gmra.mrb[0].mxu0 %v509
      %v672 = vpop.f32.mrb[0].mxu0
      %v673 = vadd.f32 %v436, %v672
      %v674 = vpop.f32.mrb[0].mxu0
      %v675 = vpop.f32.mrb[0].mxu0
      %v676 = vadd.f32 %v436, %v675
      %v677 = vpop.f32.mrb[0].mxu0
      %678 = vmatprep.mubr.bf16.mxu0 0
      %679 = vmatmul.mubr.bf16.gmra.mrb[0].mxu0 %v510
      %v680 = vpop.f32.mrb[0].mxu0
      %v681 = vadd.f32 %v436, %v680
      %v682 = vpop.f32.mrb[0].mxu0
      %v683 = vpop.f32.mrb[0].mxu0
      %v684 = vadd.f32 %v436, %v683
      %v685 = vpop.f32.mrb[0].mxu0
      %686 = vmatprep.mubr.bf16.mxu0 0
      %687 = vmatmul.mubr.bf16.gmra.mrb[0].mxu0 %v511
      %v688 = vpop.f32.mrb[0].mxu0
      %v689 = vadd.f32 %v436, %v688
      %v690 = vpop.f32.mrb[0].mxu0
      %v691 = vpop.f32.mrb[0].mxu0
      %v692 = vadd.f32 %v436, %v691
      %v693 = vpop.f32.mrb[0].mxu0
      %694 = vmatprep.mubr.bf16.mxu0 0
      %695 = vmatmul.mubr.bf16.gmra.mrb[0].mxu0 %v512
      %v696 = vpop.f32.mrb[0].mxu0
      %v697 = vadd.f32 %v436, %v696
      %v698 = vpop.f32.mrb[0].mxu0
      %v699 = vpop.f32.mrb[0].mxu0
      %v700 = vadd.f32 %v436, %v699
      %v701 = vpop.f32.mrb[0].mxu0
      %702 = vmatprep.mubr.bf16.mxu0 0
      %703 = vmatmul.mubr.bf16.gmra.mrb[0].mxu0 %v513
      %v704 = vpop.f32.mrb[0].mxu0
      %v705 = vadd.f32 %v436, %v704
      %v706 = vpop.f32.mrb[0].mxu0
      %v707 = vpop.f32.mrb[0].mxu0
      %v708 = vadd.f32 %v436, %v707
      %v709 = vpop.f32.mrb[0].mxu0
      %710 = vmatprep.mubr.bf16.mxu0 0
      %711 = vmatmul.mubr.bf16.gmra.mrb[0].mxu0 %v514
      %v712 = vpop.f32.mrb[0].mxu0
      %v713 = vadd.f32 %v436, %v712
      %v714 = vpop.f32.mrb[0].mxu0
      %v715 = vpop.f32.mrb[0].mxu0
      %v716 = vadd.f32 %v436, %v715
      %v717 = vpop.f32.mrb[0].mxu0
      %718 = vmatprep.mubr.bf16.mxu0 0
      %719 = vmatmul.mubr.bf16.gmra.mrb[0].mxu0 %v515
      %v720 = vpop.f32.mrb[0].mxu0
      %v721 = vadd.f32 %v436, %v720
      %v722 = vpop.f32.mrb[0].mxu0
      %v723 = vpop.f32.mrb[0].mxu0
      %v724 = vadd.f32 %v436, %v723
      %v725 = vpop.f32.mrb[0].mxu0
      %726 = vmatprep.mubr.bf16.mxu0 0
      %727 = vmatmul.mubr.bf16.gmra.mrb[0].mxu0 %v516
      %v728 = vpop.f32.mrb[0].mxu0
      %v729 = vadd.f32 %v436, %v728
      %v730 = vpop.f32.mrb[0].mxu0
      %v731 = vpop.f32.mrb[0].mxu0
      %v732 = vadd.f32 %v436, %v731
      %v733 = vpop.f32.mrb[0].mxu0
      %734 = vmatprep.mubr.bf16.mxu0 0
      %735 = vmatmul.mubr.bf16.gmra.mrb[0].mxu0 %v517
      %v736 = vpop.f32.mrb[0].mxu0
      %v737 = vadd.f32 %v436, %v736
      %v738 = vpop.f32.mrb[0].mxu0
      %v739 = vpop.f32.mrb[0].mxu0
      %v740 = vadd.f32 %v436, %v739
      %v741 = vpop.f32.mrb[0].mxu0
      %742 = vdwg.mxu0
      %v743 = vld [vmem:[%s274] sm:$0xff]
      %v744 = vld [vmem:[%s274 + $0x8] sm:$0xff]
      %v745 = vld [vmem:[%s274 + $0x10] sm:$0xff]
      %v746 = vld [vmem:[%s274 + $0x18] sm:$0xff]
      %v747 = vld [vmem:[%s274 + $0x20] sm:$0xff]
      %v748 = vld [vmem:[%s274 + $0x28] sm:$0xff]
      %v749 = vld [vmem:[%s274 + $0x30] sm:$0xff]
      %v750 = vld [vmem:[%s274 + $0x38] sm:$0xff]
      %v751 = vld [vmem:[%s274 + $0x40] sm:$0xff]
      %v752 = vld [vmem:[%s274 + $0x48] sm:$0xff]
      %v753 = vld [vmem:[%s274 + $0x50] sm:$0xff]
      %v754 = vld [vmem:[%s274 + $0x58] sm:$0xff]
      %v755 = vld [vmem:[%s274 + $0x60] sm:$0xff]
      %v756 = vld [vmem:[%s274 + $0x68] sm:$0xff]
      %v757 = vld [vmem:[%s274 + $0x70] sm:$0xff]
      %v758 = vld [vmem:[%s274 + $0x78] sm:$0xff]
      %v759 = vld [vmem:[%s274 + $0x80] sm:$0xff]
      %v760 = vld [vmem:[%s274 + $0x88] sm:$0xff]
      %v761 = vld [vmem:[%s274 + $0x90] sm:$0xff]
      %v762 = vld [vmem:[%s274 + $0x98] sm:$0xff]
      %v763 = vld [vmem:[%s274 + $0xa0] sm:$0xff]
      %v764 = vld [vmem:[%s274 + $0xa8] sm:$0xff]
      %v765 = vld [vmem:[%s274 + $0xb0] sm:$0xff]
      %v766 = vld [vmem:[%s274 + $0xb8] sm:$0xff]
      %v767 = vld [vmem:[%s274 + $0xc0] sm:$0xff]
      %v768 = vld [vmem:[%s274 + $0xc8] sm:$0xff]
      %v769 = vld [vmem:[%s274 + $0xd0] sm:$0xff]
      %v770 = vld [vmem:[%s274 + $0xd8] sm:$0xff]
      %v771 = vld [vmem:[%s274 + $0xe0] sm:$0xff]
      %v772 = vld [vmem:[%s274 + $0xe8] sm:$0xff]
      %v773 = vld [vmem:[%s274 + $0xf0] sm:$0xff]
      %v774 = vld [vmem:[%s274 + $0xf8] sm:$0xff]
      %v775 = vadd.f32 %v617, %v743
      %v776 = vadd.f32 %v620, %v744
      %v777 = vadd.f32 %v625, %v745
      %v778 = vadd.f32 %v628, %v746
      %v779 = vadd.f32 %v633, %v747
      %v780 = vadd.f32 %v636, %v748
      %v781 = vadd.f32 %v641, %v749
      %v782 = vadd.f32 %v644, %v750
      %v783 = vadd.f32 %v649, %v751
      %v784 = vadd.f32 %v652, %v752
      %v785 = vadd.f32 %v657, %v753
      %v786 = vadd.f32 %v660, %v754
      %v787 = vadd.f32 %v665, %v755
      %v788 = vadd.f32 %v668, %v756
      %v789 = vadd.f32 %v673, %v757
      %v790 = vadd.f32 %v676, %v758
      %v791 = vadd.f32 %v681, %v759
      %v792 = vadd.f32 %v684, %v760
      %v793 = vadd.f32 %v689, %v761
      %v794 = vadd.f32 %v692, %v762
      %v795 = vadd.f32 %v697, %v763
      %v796 = vadd.f32 %v700, %v764
      %v797 = vadd.f32 %v705, %v765
      %v798 = vadd.f32 %v708, %v766
      %v799 = vadd.f32 %v713, %v767
      %v800 = vadd.f32 %v716, %v768
      %v801 = vadd.f32 %v721, %v769
      %v802 = vadd.f32 %v724, %v770
      %v803 = vadd.f32 %v729, %v771
      %v804 = vadd.f32 %v732, %v772
      %v805 = vadd.f32 %v737, %v773
      %v806 = vadd.f32 %v740, %v774
      %807 = vst [vmem:[%s283] sm:$0xff] %v775
      %808 = vst [vmem:[%s283 + $0x8] sm:$0xff] %v776
      %809 = vst [vmem:[%s283 + $0x10] sm:$0xff] %v777
      %810 = vst [vmem:[%s283 + $0x18] sm:$0xff] %v778
      %811 = vst [vmem:[%s283 + $0x20] sm:$0xff] %v779
      %812 = vst [vmem:[%s283 + $0x28] sm:$0xff] %v780
      %813 = vst [vmem:[%s283 + $0x30] sm:$0xff] %v781
      %814 = vst [vmem:[%s283 + $0x38] sm:$0xff] %v782
      %815 = vst [vmem:[%s283 + $0x40] sm:$0xff] %v783
      %816 = vst [vmem:[%s283 + $0x48] sm:$0xff] %v784
      %817 = vst [vmem:[%s283 + $0x50] sm:$0xff] %v785
      %818 = vst [vmem:[%s283 + $0x58] sm:$0xff] %v786
      %819 = vst [vmem:[%s283 + $0x60] sm:$0xff] %v787
      %820 = vst [vmem:[%s283 + $0x68] sm:$0xff] %v788
      %821 = vst [vmem:[%s283 + $0x70] sm:$0xff] %v789
      %822 = vst [vmem:[%s283 + $0x78] sm:$0xff] %v790
      %823 = vst [vmem:[%s283 + $0x80] sm:$0xff] %v791
      %824 = vst [vmem:[%s283 + $0x88] sm:$0xff] %v792
      %825 = vst [vmem:[%s283 + $0x90] sm:$0xff] %v793
      %826 = vst [vmem:[%s283 + $0x98] sm:$0xff] %v794
      %827 = vst [vmem:[%s283 + $0xa0] sm:$0xff] %v795
      %828 = vst [vmem:[%s283 + $0xa8] sm:$0xff] %v796
      %829 = vst [vmem:[%s283 + $0xb0] sm:$0xff] %v797
      %830 = vst [vmem:[%s283 + $0xb8] sm:$0xff] %v798
      %831 = vst [vmem:[%s283 + $0xc0] sm:$0xff] %v799
      %832 = vst [vmem:[%s283 + $0xc8] sm:$0xff] %v800
      %833 = vst [vmem:[%s283 + $0xd0] sm:$0xff] %v801
      %834 = vst [vmem:[%s283 + $0xd8] sm:$0xff] %v802
      %835 = vst [vmem:[%s283 + $0xe0] sm:$0xff] %v803
      %836 = vst [vmem:[%s283 + $0xe8] sm:$0xff] %v804
      %837 = vst [vmem:[%s283 + $0xf0] sm:$0xff] %v805
      %838 = vst [vmem:[%s283 + $0xf8] sm:$0xff] %v806
      %s839 = smul.u32 32, %s19
      %p840 = scmp.lt.s32.totalorder %s839, 63
      %s841 = scalar_select %p840, %s839, 63
      %p842 = scmp.lt.s32.totalorder %s20, 0
      %s843 = scalar_select %p842, %s20, 0
      %s844 = sadd.s32 %s843, %s841
      %s845 = smul.addr %s844, 8
      %s846 = scalar_lea.vmem %s4, %s845
      // Predicated region
      $region37: #{vunet_resnet_block.1} parent=35 // pred_check
        %p847 = pneg %p153
      $region38: #{vunet_resnet_block.1} parent=35 // pred_check_branch
        %849 = sbr.rel (%p847) target = $region40
      $region39: #{vunet_resnet_block.1} parent=35 // pred_region
        %s850 = smul.u32 32, %s19
      $region40: #{vunet_resnet_block.1} parent=35 // pred_fallthru
        _
    $region36: #{vunet_resnet_block.1} parent=5 // pred_fallthru
      _
    %p851 = scmp.le.s32.totalorder 2, %s10
    // Predicated region
    $region41: #{vunet_resnet_block.1} parent=5 // pred_check
      %p852 = pneg %p851
    $region42: #{vunet_resnet_block.1} parent=5 // pred_check_branch
      %854 = sbr.rel (%p852) target = $region44
    $region43: #{vunet_resnet_block.1} parent=5 // pred_region
      %s855 = ssub.s32 %s10, 2
      // Predicated region
      $region45: #{vunet_resnet_block.1} parent=43 // pred_check
        %p856 = pneg %p159
      $region46: #{vunet_resnet_block.1} parent=43 // pred_check_branch
        %858 = sbr.rel (%p856) target = $region48
      $region47: #{vunet_resnet_block.1} parent=43 // pred_region
        %s859 = smul.u32 32, %s21
        %p860 = scmp.lt.s32.totalorder %s859, 63
        %s861 = scalar_select %p860, %s859, 63
        %p862 = scmp.lt.s32.totalorder %s22, 0
        %s863 = scalar_select %p862, %s22, 0
        %s864 = sadd.s32 %s863, %s861
        %s865 = smul.addr %s864, 8
        %s866 = scalar_lea.vmem %s4, %s865
      $region48: #{vunet_resnet_block.1} parent=43 // pred_fallthru
        _
    $region44: #{vunet_resnet_block.1} parent=5 // pred_fallthru
      _
  $region6: #{vunet_resnet_block.1} parent=0 // loop_footer
    %s14 = sadd.s32 1, %s10
  $region7: #{vunet_resnet_block.1} parent=0 // loop_footer_branch
    %9 = sbr.rel target = $region3
  $region8: #{vunet_resnet_block.1} parent=0 // loop_exit
    _

</llo_original>
